<compile_context>
chip_gen: v6e
topology: v6e:2x2x1
jax: 0.10.0
libtpu: 0.0.40
codegen_flags: <defaults>
</compile_context>

<pallas_src>
import functools

import jax
import jax.numpy as jnp
from jax.experimental import pallas as pl
from jax.experimental.pallas import tpu as pltpu


def _round_up(x, m):
    return ((x + m - 1) // m) * m


def _linear_kernel(x_ref, w_ref, b_ref, o_ref):
    # x_ref: (TB, K) producer dtype, w_ref: (K, Np) bf16 (resident),
    # b_ref: (1, Np) f32 (resident), o_ref: (TB, Np) bf16.
    x = x_ref[...].astype(jnp.bfloat16)  # in-kernel cast: free (DMA-bound kernel)
    acc = jnp.dot(x, w_ref[...], preferred_element_type=jnp.float32)
    o_ref[...] = (acc + b_ref[...]).astype(o_ref.dtype)


@functools.partial(jax.jit, static_argnames=("tb",))
def linear_fc_pallas(feats, w_t, bias_2d, *, tb):
    """feats: (B, K) any float dtype, w_t: (K, N_pad) bf16, bias_2d: (1, N_pad) f32.

    N_pad is a multiple of 128.  Batch is NOT padded: the grid is ragged and the
    last block's out-of-bounds rows are masked on store.  Returns (B, N_pad) bf16.
    """
    B, K = feats.shape
    _, Np = w_t.shape
    grid = (pl.cdiv(B, tb),)

    cost = pl.CostEstimate(
        flops=2 * B * K * Np,
        transcendentals=0,
        bytes_accessed=B * K * feats.dtype.itemsize + K * Np * 2 + Np * 4 + B * Np * 2,
    )

    return pl.pallas_call(
        _linear_kernel,
        out_shape=jax.ShapeDtypeStruct((B, Np), jnp.bfloat16),
        grid_spec=pl.GridSpec(
            grid=grid,
            in_specs=[
                pl.BlockSpec((tb, K), lambda i: (i, 0)),   # feats tile: streams (ragged last block OK)
                pl.BlockSpec((K, Np), lambda i: (0, 0)),   # weight: VMEM-resident across the grid
                pl.BlockSpec((1, Np), lambda i: (0, 0)),   # bias: VMEM-resident across the grid
            ],
            out_specs=pl.BlockSpec((tb, Np), lambda i: (i, 0)),
        ),
        compiler_params=pltpu.CompilerParams(
            dimension_semantics=("parallel",),       # v7x 2-TC sharding of the batch axis
            vmem_limit_bytes=32 * 1024 * 1024,       # > v5e's 16 MiB scoped default; <= v7x 64 MiB phys
        ),
        cost_estimate=cost,
    )(feats, w_t, bias_2d)


class LinearClassifierPallas:
    """bkey='' -> backbone is Identity; only the fc Linear layer has parameters."""

    # TODO(synk): the bkey != '' path (pretrained BackBone + checkpoint loading)
    # has no in-script equivalent; only the Identity-backbone + fc path is implemented.

    MAX_BATCH_TILE = 1024  # f32 feats @ K=2048 -> ~8 MiB/tile (16 MiB double-buffered).

    def __init__(self, num_classes=10, feat_dim=2048, key=None):
        if key is None:
            key = jax.random.PRNGKey(0)
        kw, kb = jax.random.split(key)
        # nn.Linear default init: kaiming_uniform_(a=sqrt(5)) == U(-1/sqrt(K), 1/sqrt(K)).
        bound = 1.0 / (feat_dim ** 0.5)
        # PyTorch layout: weight (num_classes, feat_dim), bias (num_classes,)
        self.weight = jax.random.uniform(
            kw, (num_classes, feat_dim), jnp.float32, -bound, bound
        )
        self.bias = jax.random.uniform(
            kb, (num_classes,), jnp.float32, -bound, bound
        )
        self.num_classes = num_classes
        self.feat_dim = feat_dim

        # Pre-transpose / pre-pad (lane dim only) / pre-cast the fc params once.
        # K needs no padding: the weight / feats blocks span the full K extent.
        self.n_pad = _round_up(num_classes, 128)
        w_t = jnp.pad(self.weight.T, ((0, 0), (0, self.n_pad - num_classes)))
        self.w_t_padded = w_t.astype(jnp.bfloat16)                 # (K, N_pad) bf16
        self.bias_padded = (
            jnp.pad(self.bias, (0, self.n_pad - num_classes))
            .reshape(1, -1)
            .astype(jnp.float32)                                    # (1, N_pad) f32
        )

    def __call__(self, x):
        if isinstance(x, (list, tuple)):
            # Mean over stacked views via a running sum (no (n_aug, B, K) stack
            # materialized in HBM before the memory-bound kernel).
            acc = jnp.reshape(x[0], (x[0].shape[0], -1))
            for xi in x[1:]:
                acc = acc + jnp.reshape(xi, (xi.shape[0], -1))
            feats = acc / float(len(x))
        else:
            feats = jnp.reshape(x, (x.shape[0], -1))  # flatten(start_dim=1): view, no copy

        B, K = feats.shape
        assert K == self.feat_dim, f"expected feat_dim={self.feat_dim}, got {K}"

        # Batch tile: at most MAX_BATCH_TILE, but no bigger than ~ceil(B/2) so the
        # grid has >=2 "parallel" steps when B allows (keeps both v7x TCs busy;
        # negligible cost on single-TC v5e/v6e).  Rounded to 8 sublanes.
        tb = min(self.MAX_BATCH_TILE, _round_up(max(-(-B // 2), 1), 8))

        preds = linear_fc_pallas(feats, self.w_t_padded, self.bias_padded, tb=tb)
        # Tiny (B, num_classes) slice; cast the logits back to f32 here.
        return preds[:, : self.num_classes].astype(jnp.float32)


if __name__ == "__main__":
    key = jax.random.PRNGKey(0)
    k_in, k_params = jax.random.split(key)

    batch, feat_dim, num_classes = 2, 2048, 10
    # Features coming out of the (identity) backbone; flatten(start_dim=1) is a no-op.
    x = jax.random.normal(k_in, (batch, feat_dim), dtype=jnp.float32)

    model = LinearClassifierPallas(
        num_classes=num_classes, feat_dim=feat_dim, key=k_params
    )

    preds = jax.block_until_ready(model(x))

    # Reference check in plain JAX (f32).  bf16 activations/weights/output inside
    # the kernel => loosened tolerance; classification (argmax) is unaffected.
    ref = x @ model.weight.T + model.bias
    assert preds.shape == (batch, num_classes)
    assert jnp.allclose(preds, ref, atol=2e-2, rtol=2e-2), (
        float(jnp.max(jnp.abs(preds - ref)))
    )

    # List-of-augmentations branch (mean over views).
    x2 = jax.random.normal(jax.random.PRNGKey(1), (batch, feat_dim), dtype=jnp.float32)
    preds_list = jax.block_until_ready(model([x, x2]))
    ref_list = ((x + x2) * 0.5) @ model.weight.T + model.bias
    assert jnp.allclose(preds_list, ref_list, atol=2e-2, rtol=2e-2), (
        float(jnp.max(jnp.abs(preds_list - ref_list)))
    )

    print("KERNEL_OK")
</pallas_src>

<mosaic_0001>
module attributes {stable_mosaic.version = 11 : i64} {
  func.func @_linear_kernel(%arg0: i32, %arg1: memref<8x2048xf32, #tpu.memory_space<vmem>>, %arg2: memref<2048x128xbf16, #tpu.memory_space<vmem>>, %arg3: memref<1x128xf32, #tpu.memory_space<vmem>>, %arg4: memref<8x128xbf16, #tpu.memory_space<vmem>>) attributes {dimension_semantics = [#tpu.dimension_semantics<parallel>], iteration_bounds = array<i64: 1>, scalar_prefetch = 0 : i64, scratch_operands = 0 : i64, tpu.core_type = #tpu.core_type<tc>, window_params = [{transform_indices = @transform_0, window_bounds = array<i64: 8, 2048>}, {pipeline_mode = #tpu.pipeline_mode<synchronous>, transform_indices = @transform_1, window_bounds = array<i64: 2048, 128>}, {pipeline_mode = #tpu.pipeline_mode<synchronous>, transform_indices = @transform_2, window_bounds = array<i64: 1, 128>}, {transform_indices = @transform_3, window_bounds = array<i64: 8, 128>}]} {
    %c0 = arith.constant 0 : index
    %c0_0 = arith.constant 0 : index
    %0 = vector.load %arg1[%c0, %c0_0] : memref<8x2048xf32, #tpu.memory_space<vmem>>, vector<8x2048xf32>
    %1 = arith.truncf %0 : vector<8x2048xf32> to vector<8x2048xbf16>
    %c0_1 = arith.constant 0 : index
    %c0_2 = arith.constant 0 : index
    %2 = vector.load %arg2[%c0_1, %c0_2] : memref<2048x128xbf16, #tpu.memory_space<vmem>>, vector<2048x128xbf16>
    %cst = arith.constant dense<0.000000e+00> : vector<8x128xf32>
    %3 = tpu.matmul %1, %2, %cst {dimension_numbers = #tpu.dot_dimension_numbers<[1], [0], [0], [1], [0, 0, 1, 1], [], []>} : vector<8x2048xbf16>, vector<2048x128xbf16>, vector<8x128xf32> -> vector<8x128xf32>
    %c0_3 = arith.constant 0 : index
    %c0_4 = arith.constant 0 : index
    %4 = vector.load %arg3[%c0_3, %c0_4] : memref<1x128xf32, #tpu.memory_space<vmem>>, vector<1x128xf32>
    %5 = vector.broadcast %4 : vector<1x128xf32> to vector<8x128xf32>
    %6 = arith.addf %3, %5 : vector<8x128xf32>
    %7 = arith.truncf %6 : vector<8x128xf32> to vector<8x128xbf16>
    %c0_5 = arith.constant 0 : index
    %c0_6 = arith.constant 0 : index
    %8 = vector.load %arg4[%c0_5, %c0_6] : memref<8x128xbf16, #tpu.memory_space<vmem>>, vector<8x128xbf16>
    tpu.vector_store %arg4[%c0_5, %c0_6], %7 {strides = array<i32>} : memref<8x128xbf16, #tpu.memory_space<vmem>>, vector<8x128xbf16>,
    return
  }
  func.func @transform_0(%arg0: i32) -> (i32, i32) {
    %c0_i32 = arith.constant 0 : i32
    %c0_i32_0 = arith.constant 0 : i32
    return %arg0, %c0_i32 : i32, i32
  }
  func.func @transform_1(%arg0: i32) -> (i32, i32) {
    %c0_i32 = arith.constant 0 : i32
    %c0_i32_0 = arith.constant 0 : i32
    %c0_i32_1 = arith.constant 0 : i32
    return %c0_i32, %c0_i32_0 : i32, i32
  }
  func.func @transform_2(%arg0: i32) -> (i32, i32) {
    %c0_i32 = arith.constant 0 : i32
    %c0_i32_0 = arith.constant 0 : i32
    %c0_i32_1 = arith.constant 0 : i32
    return %c0_i32, %c0_i32_0 : i32, i32
  }
  func.func @transform_3(%arg0: i32) -> (i32, i32) {
    %c0_i32 = arith.constant 0 : i32
    %c0_i32_0 = arith.constant 0 : i32
    return %arg0, %c0_i32 : i32, i32
  }
}

</mosaic_0001>

<llo_original>
// kernel: linear_fc_pallas.1
$region0: #{linear_fc_pallas.1}
  #allocation0 [shape = 'u32[]', space=smem, size = 0x4, offset = 0x4, fixed_abs, tag = 'smem constant byte address 0x4 - core index']
  #allocation1 [shape = 'u32[144,128]{1,0:T(1,128)}', space=vmem, size = 0x12000, scoped, tag = 'internal scratch']
  %s0 = inlined_call_operand.hbm [shape: f32[2,2048], index: 0, kind: input, shape index: {}]
  %s1 = inlined_call_operand.hbm [shape: bf16[2048,128], index: 1, kind: input, shape index: {}]
  %s2 = inlined_call_operand.vmem [shape: f32[1,128], index: 2, kind: input, shape index: {}]
  %s3 = inlined_call_operand.hbm [shape: bf16[2,128], index: 3, kind: output, shape index: {}]
  %s4 = sld [smem:[#allocation0]]
  $region30: #{linear_fc_pallas.1} parent=0
    _
  %s6 = ssub.s32 1, %s4
  %s7 = scalar_select 0, %s6, %s4
  $region1: #{linear_fc_pallas.1} parent=0
    #allocation2 [shape = 'u8[65536]{0}', space=vmem, size = 0x10000, scoped, tag = 'input window, operand 0, single buffered']
    #allocation3 [shape = 's32[1]{0}', space=sflag, size = 0x4, scoped, tag = 'scoped memory for linear_fc_pallas.1']
    #allocation4 [shape = 's32[1]{0}', space=sflag, size = 0x4, scoped, tag = 'scoped memory for linear_fc_pallas.1']
    #allocation5 [shape = 'u8[524288]{0}', space=vmem, size = 0x80000, scoped, tag = 'input window, operand 1, single buffered']
    #allocation6 [shape = 's32[1]{0}', space=sflag, size = 0x4, scoped, tag = 'scoped memory for linear_fc_pallas.1']
    #allocation7 [shape = 'u8[2048]{0}', space=vmem, size = 0x800, scoped, tag = 'output window, operand 0, single buffered']
    %8 = vsyncpa [#allocation3], 0
    %9 = vsyncpa [#allocation6], 0
    %10 = vsyncpa [#allocation4], 0
    // Predicated region
    $region2: #{linear_fc_pallas.1} parent=1 // pred_check
      _
    $region3: #{linear_fc_pallas.1} parent=1 // pred_check_branch
      %12 = sbr.rel (0) target = $region5
    $region4: #{linear_fc_pallas.1} parent=1 // pred_region
      %s14 = ssub.s32 2048, 512
      %15 = vsyncadd [#allocation3], %s14
      %s16 = sshll.u32 [#allocation2], 4
      %s17 = int_to_ptr.vmem [resolvable:$true] %s16
      %22 = dma.hbm_to_vmem [thread:$0]  %s0, 512, %s17, [#allocation3], 512, 512, 32
    $region5: #{linear_fc_pallas.1} parent=1 // pred_fallthru
      _
    // Predicated region
    $region6: #{linear_fc_pallas.1} parent=1 // pred_check
      _
    $region7: #{linear_fc_pallas.1} parent=1 // pred_check_branch
      %24 = sbr.rel (0) target = $region9
    $region8: #{linear_fc_pallas.1} parent=1 // pred_region
      %s26 = ssub.s32 16384, 16384
      %27 = vsyncadd [#allocation6], %s26
      %s28 = sshll.u32 [#allocation5], 4
      %s29 = int_to_ptr.vmem [resolvable:$true] %s28
      %34 = dma.hbm_to_vmem [thread:$0]  %s1, 16384, %s29, [#allocation6], 64, 64, 4
    $region9: #{linear_fc_pallas.1} parent=1 // pred_fallthru
      _
    // Predicated region
    $region10: #{linear_fc_pallas.1} parent=1 // pred_check
      _
    $region11: #{linear_fc_pallas.1} parent=1 // pred_check_branch
      %36 = sbr.rel (0) target = $region13
    $region12: #{linear_fc_pallas.1} parent=1 // pred_region
      _
    $region13: #{linear_fc_pallas.1} parent=1 // pred_fallthru
      _
    // Predicated region
    $region14: #{linear_fc_pallas.1} parent=1 // pred_check
      _
    $region15: #{linear_fc_pallas.1} parent=1 // pred_check_branch
      %38 = sbr.rel (0) target = $region17
    $region16: #{linear_fc_pallas.1} parent=1 // pred_region
      %39 = dma.done [#allocation3], 2048
    $region17: #{linear_fc_pallas.1} parent=1 // pred_fallthru
      _
    // Predicated region
    $region18: #{linear_fc_pallas.1} parent=1 // pred_check
      _
    $region19: #{linear_fc_pallas.1} parent=1 // pred_check_branch
      %41 = sbr.rel (0) target = $region21
    $region20: #{linear_fc_pallas.1} parent=1 // pred_region
      %42 = dma.done [#allocation6], 16384
    $region21: #{linear_fc_pallas.1} parent=1 // pred_fallthru
      _
    %v44 = vld [vmem:[#allocation2] sm:$0xff]
    %v45 = vld [vmem:[#allocation2 + $0x8] sm:$0xff]
    %v46 = vld [vmem:[#allocation2 + $0x10] sm:$0xff]
    %v47 = vld [vmem:[#allocation2 + $0x18] sm:$0xff]
    %v48 = vld [vmem:[#allocation2 + $0x20] sm:$0xff]
    %v49 = vld [vmem:[#allocation2 + $0x28] sm:$0xff]
    %v50 = vld [vmem:[#allocation2 + $0x30] sm:$0xff]
    %v51 = vld [vmem:[#allocation2 + $0x38] sm:$0xff]
    %v52 = vld [vmem:[#allocation2 + $0x40] sm:$0xff]
    %v53 = vld [vmem:[#allocation2 + $0x48] sm:$0xff]
    %v54 = vld [vmem:[#allocation2 + $0x50] sm:$0xff]
    %v55 = vld [vmem:[#allocation2 + $0x58] sm:$0xff]
    %v56 = vld [vmem:[#allocation2 + $0x60] sm:$0xff]
    %v57 = vld [vmem:[#allocation2 + $0x68] sm:$0xff]
    %v58 = vld [vmem:[#allocation2 + $0x70] sm:$0xff]
    %v59 = vld [vmem:[#allocation2 + $0x78] sm:$0xff]
    %v76 = vcombine.low %v44, %v48
    %v77 = vcombine.high %v44, %v48
    %v78 = vcombine.low %v52, %v56
    %v79 = vcombine.high %v52, %v56
    %v81 = vunpack.c.l.s4 1983009808
    %v82 = vunpack.c.0.s8 %v81
    %v83 = vlaneseq
    %v84 = vshrl.u32 %v83, 7
    %v85 = vsub.s32 %v82, %v84
    %v86 = vrot.slane %v76, %v85
    %v88 = vunpack.c.l.s4 1983009808
    %v89 = vunpack.c.0.s8 %v88
    %v90 = vlaneseq
    %v91 = vshrl.u32 %v90, 7
    %v92 = vsub.s32 %v89, %v91
    %v93 = vrot.slane %v77, %v92
    %v95 = vunpack.c.l.s4 1983009808
    %v96 = vunpack.c.0.s8 %v95
    %v97 = vlaneseq
    %v98 = vshrl.u32 %v97, 7
    %v99 = vsub.s32 %v96, %v98
    %v100 = vrot.slane %v78, %v99
    %v102 = vunpack.c.l.s4 1983009808
    %v103 = vunpack.c.0.s8 %v102
    %v104 = vlaneseq
    %v105 = vshrl.u32 %v104, 7
    %v106 = vsub.s32 %v103, %v105
    %v107 = vrot.slane %v79, %v106
    %v108 = vcombine.low %v86, %v100
    %v109 = vcombine.high %v86, %v100
    %v110 = vcombine.low %v93, %v107
    %v111 = vcombine.high %v93, %v107
    %v112 = vcombine.low %v45, %v49
    %v113 = vcombine.high %v45, %v49
    %v114 = vcombine.low %v53, %v57
    %v115 = vcombine.high %v53, %v57
    %v117 = vunpack.c.l.s4 1983009808
    %v118 = vunpack.c.0.s8 %v117
    %v119 = vlaneseq
    %v120 = vshrl.u32 %v119, 7
    %v121 = vsub.s32 %v118, %v120
    %v122 = vrot.slane %v112, %v121
    %v124 = vunpack.c.l.s4 1983009808
    %v125 = vunpack.c.0.s8 %v124
    %v126 = vlaneseq
    %v127 = vshrl.u32 %v126, 7
    %v128 = vsub.s32 %v125, %v127
    %v129 = vrot.slane %v113, %v128
    %v131 = vunpack.c.l.s4 1983009808
    %v132 = vunpack.c.0.s8 %v131
    %v133 = vlaneseq
    %v134 = vshrl.u32 %v133, 7
    %v135 = vsub.s32 %v132, %v134
    %v136 = vrot.slane %v114, %v135
    %v138 = vunpack.c.l.s4 1983009808
    %v139 = vunpack.c.0.s8 %v138
    %v140 = vlaneseq
    %v141 = vshrl.u32 %v140, 7
    %v142 = vsub.s32 %v139, %v141
    %v143 = vrot.slane %v115, %v142
    %v144 = vcombine.low %v122, %v136
    %v145 = vcombine.high %v122, %v136
    %v146 = vcombine.low %v129, %v143
    %v147 = vcombine.high %v129, %v143
    %v148 = vcombine.low %v46, %v50
    %v149 = vcombine.high %v46, %v50
    %v150 = vcombine.low %v54, %v58
    %v151 = vcombine.high %v54, %v58
    %v153 = vunpack.c.l.s4 1983009808
    %v154 = vunpack.c.0.s8 %v153
    %v155 = vlaneseq
    %v156 = vshrl.u32 %v155, 7
    %v157 = vsub.s32 %v154, %v156
    %v158 = vrot.slane %v148, %v157
    %v160 = vunpack.c.l.s4 1983009808
    %v161 = vunpack.c.0.s8 %v160
    %v162 = vlaneseq
    %v163 = vshrl.u32 %v162, 7
    %v164 = vsub.s32 %v161, %v163
    %v165 = vrot.slane %v149, %v164
    %v167 = vunpack.c.l.s4 1983009808
    %v168 = vunpack.c.0.s8 %v167
    %v169 = vlaneseq
    %v170 = vshrl.u32 %v169, 7
    %v171 = vsub.s32 %v168, %v170
    %v172 = vrot.slane %v150, %v171
    %v174 = vunpack.c.l.s4 1983009808
    %v175 = vunpack.c.0.s8 %v174
    %v176 = vlaneseq
    %v177 = vshrl.u32 %v176, 7
    %v178 = vsub.s32 %v175, %v177
    %v179 = vrot.slane %v151, %v178
    %v180 = vcombine.low %v158, %v172
    %v181 = vcombine.high %v158, %v172
    %v182 = vcombine.low %v165, %v179
    %v183 = vcombine.high %v165, %v179
    %v184 = vcombine.low %v47, %v51
    %v185 = vcombine.high %v47, %v51
    %v186 = vcombine.low %v55, %v59
    %v187 = vcombine.high %v55, %v59
    %v189 = vunpack.c.l.s4 1983009808
    %v190 = vunpack.c.0.s8 %v189
    %v191 = vlaneseq
    %v192 = vshrl.u32 %v191, 7
    %v193 = vsub.s32 %v190, %v192
    %v194 = vrot.slane %v184, %v193
    %v196 = vunpack.c.l.s4 1983009808
    %v197 = vunpack.c.0.s8 %v196
    %v198 = vlaneseq
    %v199 = vshrl.u32 %v198, 7
    %v200 = vsub.s32 %v197, %v199
    %v201 = vrot.slane %v185, %v200
    %v203 = vunpack.c.l.s4 1983009808
    %v204 = vunpack.c.0.s8 %v203
    %v205 = vlaneseq
    %v206 = vshrl.u32 %v205, 7
    %v207 = vsub.s32 %v204, %v206
    %v208 = vrot.slane %v186, %v207
    %v210 = vunpack.c.l.s4 1983009808
    %v211 = vunpack.c.0.s8 %v210
    %v212 = vlaneseq
    %v213 = vshrl.u32 %v212, 7
    %v214 = vsub.s32 %v211, %v213
    %v215 = vrot.slane %v187, %v214
    %v216 = vcombine.low %v194, %v208
    %v217 = vcombine.high %v194, %v208
    %v218 = vcombine.low %v201, %v215
    %v219 = vcombine.high %v201, %v215
    %v236 = vpack.c.bf16 %v108, %v108
    %v237 = vpack.c.bf16 %v109, %v109
    %v238 = vpack.c.bf16 %v110, %v110
    %v239 = vpack.c.bf16 %v111, %v111
    %v240 = vpack.c.bf16 %v144, %v144
    %v241 = vpack.c.bf16 %v145, %v145
    %v242 = vpack.c.bf16 %v146, %v146
    %v243 = vpack.c.bf16 %v147, %v147
    %v244 = vpack.c.bf16 %v180, %v180
    %v245 = vpack.c.bf16 %v181, %v181
    %v246 = vpack.c.bf16 %v182, %v182
    %v247 = vpack.c.bf16 %v183, %v183
    %v248 = vpack.c.bf16 %v216, %v216
    %v249 = vpack.c.bf16 %v217, %v217
    %v250 = vpack.c.bf16 %v218, %v218
    %v251 = vpack.c.bf16 %v219, %v219
    %v252 = vld [vmem:[#allocation5] sm:$0xf]
    %v253 = vld [vmem:[#allocation5 + $0x4] sm:$0xf]
    %v254 = vld [vmem:[#allocation5 + $0x8] sm:$0xf]
    %v255 = vld [vmem:[#allocation5 + $0xc] sm:$0xf]
    %v256 = vld [vmem:[#allocation5 + $0x10] sm:$0xf]
    %v257 = vld [vmem:[#allocation5 + $0x14] sm:$0xf]
    %v258 = vld [vmem:[#allocation5 + $0x18] sm:$0xf]
    %v259 = vld [vmem:[#allocation5 + $0x1c] sm:$0xf]
    %v260 = vld [vmem:[#allocation5 + $0x20] sm:$0xf]
    %v261 = vld [vmem:[#allocation5 + $0x24] sm:$0xf]
    %v262 = vld [vmem:[#allocation5 + $0x28] sm:$0xf]
    %v263 = vld [vmem:[#allocation5 + $0x2c] sm:$0xf]
    %v264 = vld [vmem:[#allocation5 + $0x30] sm:$0xf]
    %v265 = vld [vmem:[#allocation5 + $0x34] sm:$0xf]
    %v266 = vld [vmem:[#allocation5 + $0x38] sm:$0xf]
    %v267 = vld [vmem:[#allocation5 + $0x3c] sm:$0xf]
    %v268 = vld [vmem:[#allocation5 + $0x40] sm:$0xf]
    %v269 = vld [vmem:[#allocation5 + $0x44] sm:$0xf]
    %v270 = vld [vmem:[#allocation5 + $0x48] sm:$0xf]
    %v271 = vld [vmem:[#allocation5 + $0x4c] sm:$0xf]
    %v272 = vld [vmem:[#allocation5 + $0x50] sm:$0xf]
    %v273 = vld [vmem:[#allocation5 + $0x54] sm:$0xf]
    %v274 = vld [vmem:[#allocation5 + $0x58] sm:$0xf]
    %v275 = vld [vmem:[#allocation5 + $0x5c] sm:$0xf]
    %v276 = vld [vmem:[#allocation5 + $0x60] sm:$0xf]
    %v277 = vld [vmem:[#allocation5 + $0x64] sm:$0xf]
    %v278 = vld [vmem:[#allocation5 + $0x68] sm:$0xf]
    %v279 = vld [vmem:[#allocation5 + $0x6c] sm:$0xf]
    %v280 = vld [vmem:[#allocation5 + $0x70] sm:$0xf]
    %v281 = vld [vmem:[#allocation5 + $0x74] sm:$0xf]
    %v282 = vld [vmem:[#allocation5 + $0x78] sm:$0xf]
    %v283 = vld [vmem:[#allocation5 + $0x7c] sm:$0xf]
    %v284 = vld [vmem:[#allocation5 + $0x80] sm:$0xf]
    %v285 = vld [vmem:[#allocation5 + $0x84] sm:$0xf]
    %v286 = vld [vmem:[#allocation5 + $0x88] sm:$0xf]
    %v287 = vld [vmem:[#allocation5 + $0x8c] sm:$0xf]
    %v288 = vld [vmem:[#allocation5 + $0x90] sm:$0xf]
    %v289 = vld [vmem:[#allocation5 + $0x94] sm:$0xf]
    %v290 = vld [vmem:[#allocation5 + $0x98] sm:$0xf]
    %v291 = vld [vmem:[#allocation5 + $0x9c] sm:$0xf]
    %v292 = vld [vmem:[#allocation5 + $0xa0] sm:$0xf]
    %v293 = vld [vmem:[#allocation5 + $0xa4] sm:$0xf]
    %v294 = vld [vmem:[#allocation5 + $0xa8] sm:$0xf]
    %v295 = vld [vmem:[#allocation5 + $0xac] sm:$0xf]
    %v296 = vld [vmem:[#allocation5 + $0xb0] sm:$0xf]
    %v297 = vld [vmem:[#allocation5 + $0xb4] sm:$0xf]
    %v298 = vld [vmem:[#allocation5 + $0xb8] sm:$0xf]
    %v299 = vld [vmem:[#allocation5 + $0xbc] sm:$0xf]
    %v300 = vld [vmem:[#allocation5 + $0xc0] sm:$0xf]
    %v301 = vld [vmem:[#allocation5 + $0xc4] sm:$0xf]
    %v302 = vld [vmem:[#allocation5 + $0xc8] sm:$0xf]
    %v303 = vld [vmem:[#allocation5 + $0xcc] sm:$0xf]
    %v304 = vld [vmem:[#allocation5 + $0xd0] sm:$0xf]
    %v305 = vld [vmem:[#allocation5 + $0xd4] sm:$0xf]
    %v306 = vld [vmem:[#allocation5 + $0xd8] sm:$0xf]
    %v307 = vld [vmem:[#allocation5 + $0xdc] sm:$0xf]
    %v308 = vld [vmem:[#allocation5 + $0xe0] sm:$0xf]
    %v309 = vld [vmem:[#allocation5 + $0xe4] sm:$0xf]
    %v310 = vld [vmem:[#allocation5 + $0xe8] sm:$0xf]
    %v311 = vld [vmem:[#allocation5 + $0xec] sm:$0xf]
    %v312 = vld [vmem:[#allocation5 + $0xf0] sm:$0xf]
    %v313 = vld [vmem:[#allocation5 + $0xf4] sm:$0xf]
    %v314 = vld [vmem:[#allocation5 + $0xf8] sm:$0xf]
    %v315 = vld [vmem:[#allocation5 + $0xfc] sm:$0xf]
    %v316 = vld [vmem:[#allocation5 + $0x100] sm:$0xf]
    %v317 = vld [vmem:[#allocation5 + $0x104] sm:$0xf]
    %v318 = vld [vmem:[#allocation5 + $0x108] sm:$0xf]
    %v319 = vld [vmem:[#allocation5 + $0x10c] sm:$0xf]
    %v320 = vld [vmem:[#allocation5 + $0x110] sm:$0xf]
    %v321 = vld [vmem:[#allocation5 + $0x114] sm:$0xf]
    %v322 = vld [vmem:[#allocation5 + $0x118] sm:$0xf]
    %v323 = vld [vmem:[#allocation5 + $0x11c] sm:$0xf]
    %v324 = vld [vmem:[#allocation5 + $0x120] sm:$0xf]
    %v325 = vld [vmem:[#allocation5 + $0x124] sm:$0xf]
    %v326 = vld [vmem:[#allocation5 + $0x128] sm:$0xf]
    %v327 = vld [vmem:[#allocation5 + $0x12c] sm:$0xf]
    %v328 = vld [vmem:[#allocation5 + $0x130] sm:$0xf]
    %v329 = vld [vmem:[#allocation5 + $0x134] sm:$0xf]
    %v330 = vld [vmem:[#allocation5 + $0x138] sm:$0xf]
    %v331 = vld [vmem:[#allocation5 + $0x13c] sm:$0xf]
    %v332 = vld [vmem:[#allocation5 + $0x140] sm:$0xf]
    %v333 = vld [vmem:[#allocation5 + $0x144] sm:$0xf]
    %v334 = vld [vmem:[#allocation5 + $0x148] sm:$0xf]
    %v335 = vld [vmem:[#allocation5 + $0x14c] sm:$0xf]
    %v336 = vld [vmem:[#allocation5 + $0x150] sm:$0xf]
    %v337 = vld [vmem:[#allocation5 + $0x154] sm:$0xf]
    %v338 = vld [vmem:[#allocation5 + $0x158] sm:$0xf]
    %v339 = vld [vmem:[#allocation5 + $0x15c] sm:$0xf]
    %v340 = vld [vmem:[#allocation5 + $0x160] sm:$0xf]
    %v341 = vld [vmem:[#allocation5 + $0x164] sm:$0xf]
    %v342 = vld [vmem:[#allocation5 + $0x168] sm:$0xf]
    %v343 = vld [vmem:[#allocation5 + $0x16c] sm:$0xf]
    %v344 = vld [vmem:[#allocation5 + $0x170] sm:$0xf]
    %v345 = vld [vmem:[#allocation5 + $0x174] sm:$0xf]
    %v346 = vld [vmem:[#allocation5 + $0x178] sm:$0xf]
    %v347 = vld [vmem:[#allocation5 + $0x17c] sm:$0xf]
    %v348 = vld [vmem:[#allocation5 + $0x180] sm:$0xf]
    %v349 = vld [vmem:[#allocation5 + $0x184] sm:$0xf]
    %v350 = vld [vmem:[#allocation5 + $0x188] sm:$0xf]
    %v351 = vld [vmem:[#allocation5 + $0x18c] sm:$0xf]
    %v352 = vld [vmem:[#allocation5 + $0x190] sm:$0xf]
    %v353 = vld [vmem:[#allocation5 + $0x194] sm:$0xf]
    %v354 = vld [vmem:[#allocation5 + $0x198] sm:$0xf]
    %v355 = vld [vmem:[#allocation5 + $0x19c] sm:$0xf]
    %v356 = vld [vmem:[#allocation5 + $0x1a0] sm:$0xf]
    %v357 = vld [vmem:[#allocation5 + $0x1a4] sm:$0xf]
    %v358 = vld [vmem:[#allocation5 + $0x1a8] sm:$0xf]
    %v359 = vld [vmem:[#allocation5 + $0x1ac] sm:$0xf]
    %v360 = vld [vmem:[#allocation5 + $0x1b0] sm:$0xf]
    %v361 = vld [vmem:[#allocation5 + $0x1b4] sm:$0xf]
    %v362 = vld [vmem:[#allocation5 + $0x1b8] sm:$0xf]
    %v363 = vld [vmem:[#allocation5 + $0x1bc] sm:$0xf]
    %v364 = vld [vmem:[#allocation5 + $0x1c0] sm:$0xf]
    %v365 = vld [vmem:[#allocation5 + $0x1c4] sm:$0xf]
    %v366 = vld [vmem:[#allocation5 + $0x1c8] sm:$0xf]
    %v367 = vld [vmem:[#allocation5 + $0x1cc] sm:$0xf]
    %v368 = vld [vmem:[#allocation5 + $0x1d0] sm:$0xf]
    %v369 = vld [vmem:[#allocation5 + $0x1d4] sm:$0xf]
    %v370 = vld [vmem:[#allocation5 + $0x1d8] sm:$0xf]
    %v371 = vld [vmem:[#allocation5 + $0x1dc] sm:$0xf]
    %v372 = vld [vmem:[#allocation5 + $0x1e0] sm:$0xf]
    %v373 = vld [vmem:[#allocation5 + $0x1e4] sm:$0xf]
    %v374 = vld [vmem:[#allocation5 + $0x1e8] sm:$0xf]
    %v375 = vld [vmem:[#allocation5 + $0x1ec] sm:$0xf]
    %v376 = vld [vmem:[#allocation5 + $0x1f0] sm:$0xf]
    %v377 = vld [vmem:[#allocation5 + $0x1f4] sm:$0xf]
    %v378 = vld [vmem:[#allocation5 + $0x1f8] sm:$0xf]
    %v379 = vld [vmem:[#allocation5 + $0x1fc] sm:$0xf]
    %v380 = vld [vmem:[#allocation5 + $0x200] sm:$0xf]
    %v381 = vld [vmem:[#allocation5 + $0x204] sm:$0xf]
    %v382 = vld [vmem:[#allocation5 + $0x208] sm:$0xf]
    %v383 = vld [vmem:[#allocation5 + $0x20c] sm:$0xf]
    %v384 = vld [vmem:[#allocation5 + $0x210] sm:$0xf]
    %v385 = vld [vmem:[#allocation5 + $0x214] sm:$0xf]
    %v386 = vld [vmem:[#allocation5 + $0x218] sm:$0xf]
    %v387 = vld [vmem:[#allocation5 + $0x21c] sm:$0xf]
    %v388 = vld [vmem:[#allocation5 + $0x220] sm:$0xf]
    %v389 = vld [vmem:[#allocation5 + $0x224] sm:$0xf]
    %v390 = vld [vmem:[#allocation5 + $0x228] sm:$0xf]
    %v391 = vld [vmem:[#allocation5 + $0x22c] sm:$0xf]
    %v392 = vld [vmem:[#allocation5 + $0x230] sm:$0xf]
    %v393 = vld [vmem:[#allocation5 + $0x234] sm:$0xf]
    %v394 = vld [vmem:[#allocation5 + $0x238] sm:$0xf]
    %v395 = vld [vmem:[#allocation5 + $0x23c] sm:$0xf]
    %v396 = vld [vmem:[#allocation5 + $0x240] sm:$0xf]
    %v397 = vld [vmem:[#allocation5 + $0x244] sm:$0xf]
    %v398 = vld [vmem:[#allocation5 + $0x248] sm:$0xf]
    %v399 = vld [vmem:[#allocation5 + $0x24c] sm:$0xf]
    %v400 = vld [vmem:[#allocation5 + $0x250] sm:$0xf]
    %v401 = vld [vmem:[#allocation5 + $0x254] sm:$0xf]
    %v402 = vld [vmem:[#allocation5 + $0x258] sm:$0xf]
    %v403 = vld [vmem:[#allocation5 + $0x25c] sm:$0xf]
    %v404 = vld [vmem:[#allocation5 + $0x260] sm:$0xf]
    %v405 = vld [vmem:[#allocation5 + $0x264] sm:$0xf]
    %v406 = vld [vmem:[#allocation5 + $0x268] sm:$0xf]
    %v407 = vld [vmem:[#allocation5 + $0x26c] sm:$0xf]
    %v408 = vld [vmem:[#allocation5 + $0x270] sm:$0xf]
    %v409 = vld [vmem:[#allocation5 + $0x274] sm:$0xf]
    %v410 = vld [vmem:[#allocation5 + $0x278] sm:$0xf]
    %v411 = vld [vmem:[#allocation5 + $0x27c] sm:$0xf]
    %v412 = vld [vmem:[#allocation5 + $0x280] sm:$0xf]
    %v413 = vld [vmem:[#allocation5 + $0x284] sm:$0xf]
    %v414 = vld [vmem:[#allocation5 + $0x288] sm:$0xf]
    %v415 = vld [vmem:[#allocation5 + $0x28c] sm:$0xf]
    %v416 = vld [vmem:[#allocation5 + $0x290] sm:$0xf]
    %v417 = vld [vmem:[#allocation5 + $0x294] sm:$0xf]
    %v418 = vld [vmem:[#allocation5 + $0x298] sm:$0xf]
    %v419 = vld [vmem:[#allocation5 + $0x29c] sm:$0xf]
    %v420 = vld [vmem:[#allocation5 + $0x2a0] sm:$0xf]
    %v421 = vld [vmem:[#allocation5 + $0x2a4] sm:$0xf]
    %v422 = vld [vmem:[#allocation5 + $0x2a8] sm:$0xf]
    %v423 = vld [vmem:[#allocation5 + $0x2ac] sm:$0xf]
    %v424 = vld [vmem:[#allocation5 + $0x2b0] sm:$0xf]
    %v425 = vld [vmem:[#allocation5 + $0x2b4] sm:$0xf]
    %v426 = vld [vmem:[#allocation5 + $0x2b8] sm:$0xf]
    %v427 = vld [vmem:[#allocation5 + $0x2bc] sm:$0xf]
    %v428 = vld [vmem:[#allocation5 + $0x2c0] sm:$0xf]
    %v429 = vld [vmem:[#allocation5 + $0x2c4] sm:$0xf]
    %v430 = vld [vmem:[#allocation5 + $0x2c8] sm:$0xf]
    %v431 = vld [vmem:[#allocation5 + $0x2cc] sm:$0xf]
    %v432 = vld [vmem:[#allocation5 + $0x2d0] sm:$0xf]
    %v433 = vld [vmem:[#allocation5 + $0x2d4] sm:$0xf]
    %v434 = vld [vmem:[#allocation5 + $0x2d8] sm:$0xf]
    %v435 = vld [vmem:[#allocation5 + $0x2dc] sm:$0xf]
    %v436 = vld [vmem:[#allocation5 + $0x2e0] sm:$0xf]
    %v437 = vld [vmem:[#allocation5 + $0x2e4] sm:$0xf]
    %v438 = vld [vmem:[#allocation5 + $0x2e8] sm:$0xf]
    %v439 = vld [vmem:[#allocation5 + $0x2ec] sm:$0xf]
    %v440 = vld [vmem:[#allocation5 + $0x2f0] sm:$0xf]
    %v441 = vld [vmem:[#allocation5 + $0x2f4] sm:$0xf]
    %v442 = vld [vmem:[#allocation5 + $0x2f8] sm:$0xf]
    %v443 = vld [vmem:[#allocation5 + $0x2fc] sm:$0xf]
    %v444 = vld [vmem:[#allocation5 + $0x300] sm:$0xf]
    %v445 = vld [vmem:[#allocation5 + $0x304] sm:$0xf]
    %v446 = vld [vmem:[#allocation5 + $0x308] sm:$0xf]
    %v447 = vld [vmem:[#allocation5 + $0x30c] sm:$0xf]
    %v448 = vld [vmem:[#allocation5 + $0x310] sm:$0xf]
    %v449 = vld [vmem:[#allocation5 + $0x314] sm:$0xf]
    %v450 = vld [vmem:[#allocation5 + $0x318] sm:$0xf]
    %v451 = vld [vmem:[#allocation5 + $0x31c] sm:$0xf]
    %v452 = vld [vmem:[#allocation5 + $0x320] sm:$0xf]
    %v453 = vld [vmem:[#allocation5 + $0x324] sm:$0xf]
    %v454 = vld [vmem:[#allocation5 + $0x328] sm:$0xf]
    %v455 = vld [vmem:[#allocation5 + $0x32c] sm:$0xf]
    %v456 = vld [vmem:[#allocation5 + $0x330] sm:$0xf]
    %v457 = vld [vmem:[#allocation5 + $0x334] sm:$0xf]
    %v458 = vld [vmem:[#allocation5 + $0x338] sm:$0xf]
    %v459 = vld [vmem:[#allocation5 + $0x33c] sm:$0xf]
    %v460 = vld [vmem:[#allocation5 + $0x340] sm:$0xf]
    %v461 = vld [vmem:[#allocation5 + $0x344] sm:$0xf]
    %v462 = vld [vmem:[#allocation5 + $0x348] sm:$0xf]
    %v463 = vld [vmem:[#allocation5 + $0x34c] sm:$0xf]
    %v464 = vld [vmem:[#allocation5 + $0x350] sm:$0xf]
    %v465 = vld [vmem:[#allocation5 + $0x354] sm:$0xf]
    %v466 = vld [vmem:[#allocation5 + $0x358] sm:$0xf]
    %v467 = vld [vmem:[#allocation5 + $0x35c] sm:$0xf]
    %v468 = vld [vmem:[#allocation5 + $0x360] sm:$0xf]
    %v469 = vld [vmem:[#allocation5 + $0x364] sm:$0xf]
    %v470 = vld [vmem:[#allocation5 + $0x368] sm:$0xf]
    %v471 = vld [vmem:[#allocation5 + $0x36c] sm:$0xf]
    %v472 = vld [vmem:[#allocation5 + $0x370] sm:$0xf]
    %v473 = vld [vmem:[#allocation5 + $0x374] sm:$0xf]
    %v474 = vld [vmem:[#allocation5 + $0x378] sm:$0xf]
    %v475 = vld [vmem:[#allocation5 + $0x37c] sm:$0xf]
    %v476 = vld [vmem:[#allocation5 + $0x380] sm:$0xf]
    %v477 = vld [vmem:[#allocation5 + $0x384] sm:$0xf]
    %v478 = vld [vmem:[#allocation5 + $0x388] sm:$0xf]
    %v479 = vld [vmem:[#allocation5 + $0x38c] sm:$0xf]
    %v480 = vld [vmem:[#allocation5 + $0x390] sm:$0xf]
    %v481 = vld [vmem:[#allocation5 + $0x394] sm:$0xf]
    %v482 = vld [vmem:[#allocation5 + $0x398] sm:$0xf]
    %v483 = vld [vmem:[#allocation5 + $0x39c] sm:$0xf]
    %v484 = vld [vmem:[#allocation5 + $0x3a0] sm:$0xf]
    %v485 = vld [vmem:[#allocation5 + $0x3a4] sm:$0xf]
    %v486 = vld [vmem:[#allocation5 + $0x3a8] sm:$0xf]
    %v487 = vld [vmem:[#allocation5 + $0x3ac] sm:$0xf]
    %v488 = vld [vmem:[#allocation5 + $0x3b0] sm:$0xf]
    %v489 = vld [vmem:[#allocation5 + $0x3b4] sm:$0xf]
    %v490 = vld [vmem:[#allocation5 + $0x3b8] sm:$0xf]
    %v491 = vld [vmem:[#allocation5 + $0x3bc] sm:$0xf]
    %v492 = vld [vmem:[#allocation5 + $0x3c0] sm:$0xf]
    %v493 = vld [vmem:[#allocation5 + $0x3c4] sm:$0xf]
    %v494 = vld [vmem:[#allocation5 + $0x3c8] sm:$0xf]
    %v495 = vld [vmem:[#allocation5 + $0x3cc] sm:$0xf]
    %v496 = vld [vmem:[#allocation5 + $0x3d0] sm:$0xf]
    %v497 = vld [vmem:[#allocation5 + $0x3d4] sm:$0xf]
    %v498 = vld [vmem:[#allocation5 + $0x3d8] sm:$0xf]
    %v499 = vld [vmem:[#allocation5 + $0x3dc] sm:$0xf]
    %v500 = vld [vmem:[#allocation5 + $0x3e0] sm:$0xf]
    %v501 = vld [vmem:[#allocation5 + $0x3e4] sm:$0xf]
    %v502 = vld [vmem:[#allocation5 + $0x3e8] sm:$0xf]
    %v503 = vld [vmem:[#allocation5 + $0x3ec] sm:$0xf]
    %v504 = vld [vmem:[#allocation5 + $0x3f0] sm:$0xf]
    %v505 = vld [vmem:[#allocation5 + $0x3f4] sm:$0xf]
    %v506 = vld [vmem:[#allocation5 + $0x3f8] sm:$0xf]
    %v507 = vld [vmem:[#allocation5 + $0x3fc] sm:$0xf]
    %v508 = vld [vmem:[%s2] sm:$0x1]
    %v510 = vlaneseq
    %v511 = vshrl.u32 %v510, 7
    %v512 = vsub.s32 0, %v511
    %v513 = vrot.slane %v508, %v512
    %v771 = vunpack.c.l.b16 %v252
    %v772 = vunpack.c.l.b16 %v253
    %v773 = vunpack.c.l.b16 %v254
    %v774 = vunpack.c.l.b16 %v255
    %v775 = vunpack.c.l.b16 %v256
    %v776 = vunpack.c.l.b16 %v257
    %v777 = vunpack.c.l.b16 %v258
    %v778 = vunpack.c.l.b16 %v259
    %v779 = vunpack.c.l.b16 %v260
    %v780 = vunpack.c.l.b16 %v261
    %v781 = vunpack.c.l.b16 %v262
    %v782 = vunpack.c.l.b16 %v263
    %v783 = vunpack.c.l.b16 %v264
    %v784 = vunpack.c.l.b16 %v265
    %v785 = vunpack.c.l.b16 %v266
    %v786 = vunpack.c.l.b16 %v267
    %v787 = vunpack.c.l.b16 %v268
    %v788 = vunpack.c.l.b16 %v269
    %v789 = vunpack.c.l.b16 %v270
    %v790 = vunpack.c.l.b16 %v271
    %v791 = vunpack.c.l.b16 %v272
    %v792 = vunpack.c.l.b16 %v273
    %v793 = vunpack.c.l.b16 %v274
    %v794 = vunpack.c.l.b16 %v275
    %v795 = vunpack.c.l.b16 %v276
    %v796 = vunpack.c.l.b16 %v277
    %v797 = vunpack.c.l.b16 %v278
    %v798 = vunpack.c.l.b16 %v279
    %v799 = vunpack.c.l.b16 %v280
    %v800 = vunpack.c.l.b16 %v281
    %v801 = vunpack.c.l.b16 %v282
    %v802 = vunpack.c.l.b16 %v283
    %v803 = vunpack.c.l.b16 %v284
    %v804 = vunpack.c.l.b16 %v285
    %v805 = vunpack.c.l.b16 %v286
    %v806 = vunpack.c.l.b16 %v287
    %v807 = vunpack.c.l.b16 %v288
    %v808 = vunpack.c.l.b16 %v289
    %v809 = vunpack.c.l.b16 %v290
    %v810 = vunpack.c.l.b16 %v291
    %v811 = vunpack.c.l.b16 %v292
    %v812 = vunpack.c.l.b16 %v293
    %v813 = vunpack.c.l.b16 %v294
    %v814 = vunpack.c.l.b16 %v295
    %v815 = vunpack.c.l.b16 %v296
    %v816 = vunpack.c.l.b16 %v297
    %v817 = vunpack.c.l.b16 %v298
    %v818 = vunpack.c.l.b16 %v299
    %v819 = vunpack.c.l.b16 %v300
    %v820 = vunpack.c.l.b16 %v301
    %v821 = vunpack.c.l.b16 %v302
    %v822 = vunpack.c.l.b16 %v303
    %v823 = vunpack.c.l.b16 %v304
    %v824 = vunpack.c.l.b16 %v305
    %v825 = vunpack.c.l.b16 %v306
    %v826 = vunpack.c.l.b16 %v307
    %v827 = vunpack.c.l.b16 %v308
    %v828 = vunpack.c.l.b16 %v309
    %v829 = vunpack.c.l.b16 %v310
    %v830 = vunpack.c.l.b16 %v311
    %v831 = vunpack.c.l.b16 %v312
    %v832 = vunpack.c.l.b16 %v313
    %v833 = vunpack.c.l.b16 %v314
    %v834 = vunpack.c.l.b16 %v315
    %v835 = vunpack.c.l.b16 %v316
    %v836 = vunpack.c.l.b16 %v317
    %v837 = vunpack.c.l.b16 %v318
    %v838 = vunpack.c.l.b16 %v319
    %v839 = vunpack.c.l.b16 %v320
    %v840 = vunpack.c.l.b16 %v321
    %v841 = vunpack.c.l.b16 %v322
    %v842 = vunpack.c.l.b16 %v323
    %v843 = vunpack.c.l.b16 %v324
    %v844 = vunpack.c.l.b16 %v325
    %v845 = vunpack.c.l.b16 %v326
    %v846 = vunpack.c.l.b16 %v327
    %v847 = vunpack.c.l.b16 %v328
    %v848 = vunpack.c.l.b16 %v329
    %v849 = vunpack.c.l.b16 %v330
    %v850 = vunpack.c.l.b16 %v331
    %v851 = vunpack.c.l.b16 %v332
    %v852 = vunpack.c.l.b16 %v333
    %v853 = vunpack.c.l.b16 %v334
    %v854 = vunpack.c.l.b16 %v335
    %v855 = vunpack.c.l.b16 %v336
    %v856 = vunpack.c.l.b16 %v337
    %v857 = vunpack.c.l.b16 %v338
    %v858 = vunpack.c.l.b16 %v339
    %v859 = vunpack.c.l.b16 %v340
    %v860 = vunpack.c.l.b16 %v341
    %v861 = vunpack.c.l.b16 %v342
    %v862 = vunpack.c.l.b16 %v343
    %v863 = vunpack.c.l.b16 %v344
    %v864 = vunpack.c.l.b16 %v345
    %v865 = vunpack.c.l.b16 %v346
    %v866 = vunpack.c.l.b16 %v347
    %v867 = vunpack.c.l.b16 %v348
    %v868 = vunpack.c.l.b16 %v349
    %v869 = vunpack.c.l.b16 %v350
    %v870 = vunpack.c.l.b16 %v351
    %v871 = vunpack.c.l.b16 %v352
    %v872 = vunpack.c.l.b16 %v353
    %v873 = vunpack.c.l.b16 %v354
    %v874 = vunpack.c.l.b16 %v355
    %v875 = vunpack.c.l.b16 %v356
    %v876 = vunpack.c.l.b16 %v357
    %v877 = vunpack.c.l.b16 %v358
    %v878 = vunpack.c.l.b16 %v359
    %v879 = vunpack.c.l.b16 %v360
    %v880 = vunpack.c.l.b16 %v361
    %v881 = vunpack.c.l.b16 %v362
    %v882 = vunpack.c.l.b16 %v363
    %v883 = vunpack.c.l.b16 %v364
    %v884 = vunpack.c.l.b16 %v365
    %v885 = vunpack.c.l.b16 %v366
    %v886 = vunpack.c.l.b16 %v367
    %v887 = vunpack.c.l.b16 %v368
    %v888 = vunpack.c.l.b16 %v369
    %v889 = vunpack.c.l.b16 %v370
    %v890 = vunpack.c.l.b16 %v371
    %v891 = vunpack.c.l.b16 %v372
    %v892 = vunpack.c.l.b16 %v373
    %v893 = vunpack.c.l.b16 %v374
    %v894 = vunpack.c.l.b16 %v375
    %v895 = vunpack.c.l.b16 %v376
    %v896 = vunpack.c.l.b16 %v377
    %v897 = vunpack.c.l.b16 %v378
    %v898 = vunpack.c.l.b16 %v379
    %v899 = vunpack.c.l.b16 %v380
    %v900 = vunpack.c.l.b16 %v381
    %v901 = vunpack.c.l.b16 %v382
    %v902 = vunpack.c.l.b16 %v383
    %v903 = vunpack.c.l.b16 %v384
    %v904 = vunpack.c.l.b16 %v385
    %v905 = vunpack.c.l.b16 %v386
    %v906 = vunpack.c.l.b16 %v387
    %v907 = vunpack.c.l.b16 %v388
    %v908 = vunpack.c.l.b16 %v389
    %v909 = vunpack.c.l.b16 %v390
    %v910 = vunpack.c.l.b16 %v391
    %v911 = vunpack.c.l.b16 %v392
    %v912 = vunpack.c.l.b16 %v393
    %v913 = vunpack.c.l.b16 %v394
    %v914 = vunpack.c.l.b16 %v395
    %v915 = vunpack.c.l.b16 %v396
    %v916 = vunpack.c.l.b16 %v397
    %v917 = vunpack.c.l.b16 %v398
    %v918 = vunpack.c.l.b16 %v399
    %v919 = vunpack.c.l.b16 %v400
    %v920 = vunpack.c.l.b16 %v401
    %v921 = vunpack.c.l.b16 %v402
    %v922 = vunpack.c.l.b16 %v403
    %v923 = vunpack.c.l.b16 %v404
    %v924 = vunpack.c.l.b16 %v405
    %v925 = vunpack.c.l.b16 %v406
    %v926 = vunpack.c.l.b16 %v407
    %v927 = vunpack.c.l.b16 %v408
    %v928 = vunpack.c.l.b16 %v409
    %v929 = vunpack.c.l.b16 %v410
    %v930 = vunpack.c.l.b16 %v411
    %v931 = vunpack.c.l.b16 %v412
    %v932 = vunpack.c.l.b16 %v413
    %v933 = vunpack.c.l.b16 %v414
    %v934 = vunpack.c.l.b16 %v415
    %v935 = vunpack.c.l.b16 %v416
    %v936 = vunpack.c.l.b16 %v417
    %v937 = vunpack.c.l.b16 %v418
    %v938 = vunpack.c.l.b16 %v419
    %v939 = vunpack.c.l.b16 %v420
    %v940 = vunpack.c.l.b16 %v421
    %v941 = vunpack.c.l.b16 %v422
    %v942 = vunpack.c.l.b16 %v423
    %v943 = vunpack.c.l.b16 %v424
    %v944 = vunpack.c.l.b16 %v425
    %v945 = vunpack.c.l.b16 %v426
    %v946 = vunpack.c.l.b16 %v427
    %v947 = vunpack.c.l.b16 %v428
    %v948 = vunpack.c.l.b16 %v429
    %v949 = vunpack.c.l.b16 %v430
    %v950 = vunpack.c.l.b16 %v431
    %v951 = vunpack.c.l.b16 %v432
    %v952 = vunpack.c.l.b16 %v433
    %v953 = vunpack.c.l.b16 %v434
    %v954 = vunpack.c.l.b16 %v435
    %v955 = vunpack.c.l.b16 %v436
    %v956 = vunpack.c.l.b16 %v437
    %v957 = vunpack.c.l.b16 %v438
    %v958 = vunpack.c.l.b16 %v439
    %v959 = vunpack.c.l.b16 %v440
    %v960 = vunpack.c.l.b16 %v441
    %v961 = vunpack.c.l.b16 %v442
    %v962 = vunpack.c.l.b16 %v443
    %v963 = vunpack.c.l.b16 %v444
    %v964 = vunpack.c.l.b16 %v445
    %v965 = vunpack.c.l.b16 %v446
    %v966 = vunpack.c.l.b16 %v447
    %v967 = vunpack.c.l.b16 %v448
    %v968 = vunpack.c.l.b16 %v449
    %v969 = vunpack.c.l.b16 %v450
    %v970 = vunpack.c.l.b16 %v451
    %v971 = vunpack.c.l.b16 %v452
    %v972 = vunpack.c.l.b16 %v453
    %v973 = vunpack.c.l.b16 %v454
    %v974 = vunpack.c.l.b16 %v455
    %v975 = vunpack.c.l.b16 %v456
    %v976 = vunpack.c.l.b16 %v457
    %v977 = vunpack.c.l.b16 %v458
    %v978 = vunpack.c.l.b16 %v459
    %v979 = vunpack.c.l.b16 %v460
    %v980 = vunpack.c.l.b16 %v461
    %v981 = vunpack.c.l.b16 %v462
    %v982 = vunpack.c.l.b16 %v463
    %v983 = vunpack.c.l.b16 %v464
    %v984 = vunpack.c.l.b16 %v465
    %v985 = vunpack.c.l.b16 %v466
    %v986 = vunpack.c.l.b16 %v467
    %v987 = vunpack.c.l.b16 %v468
    %v988 = vunpack.c.l.b16 %v469
    %v989 = vunpack.c.l.b16 %v470
    %v990 = vunpack.c.l.b16 %v471
    %v991 = vunpack.c.l.b16 %v472
    %v992 = vunpack.c.l.b16 %v473
    %v993 = vunpack.c.l.b16 %v474
    %v994 = vunpack.c.l.b16 %v475
    %v995 = vunpack.c.l.b16 %v476
    %v996 = vunpack.c.l.b16 %v477
    %v997 = vunpack.c.l.b16 %v478
    %v998 = vunpack.c.l.b16 %v479
    %v999 = vunpack.c.l.b16 %v480
    %v1000 = vunpack.c.l.b16 %v481
    %v1001 = vunpack.c.l.b16 %v482
    %v1002 = vunpack.c.l.b16 %v483
    %v1003 = vunpack.c.l.b16 %v484
    %v1004 = vunpack.c.l.b16 %v485
    %v1005 = vunpack.c.l.b16 %v486
    %v1006 = vunpack.c.l.b16 %v487
    %v1007 = vunpack.c.l.b16 %v488
    %v1008 = vunpack.c.l.b16 %v489
    %v1009 = vunpack.c.l.b16 %v490
    %v1010 = vunpack.c.l.b16 %v491
    %v1011 = vunpack.c.l.b16 %v492
    %v1012 = vunpack.c.l.b16 %v493
    %v1013 = vunpack.c.l.b16 %v494
    %v1014 = vunpack.c.l.b16 %v495
    %v1015 = vunpack.c.l.b16 %v496
    %v1016 = vunpack.c.l.b16 %v497
    %v1017 = vunpack.c.l.b16 %v498
    %v1018 = vunpack.c.l.b16 %v499
    %v1019 = vunpack.c.l.b16 %v500
    %v1020 = vunpack.c.l.b16 %v501
    %v1021 = vunpack.c.l.b16 %v502
    %v1022 = vunpack.c.l.b16 %v503
    %v1023 = vunpack.c.l.b16 %v504
    %v1024 = vunpack.c.l.b16 %v505
    %v1025 = vunpack.c.l.b16 %v506
    %v1026 = vunpack.c.l.b16 %v507
    %v1027 = vpack.c.b16 %v772, %v771
    %v1028 = vpack.c.b16 %v774, %v773
    %v1029 = vpack.c.b16 %v776, %v775
    %v1030 = vpack.c.b16 %v778, %v777
    %v1031 = vpack.c.b16 %v780, %v779
    %v1032 = vpack.c.b16 %v782, %v781
    %v1033 = vpack.c.b16 %v784, %v783
    %v1034 = vpack.c.b16 %v786, %v785
    %v1035 = vpack.c.b16 %v788, %v787
    %v1036 = vpack.c.b16 %v790, %v789
    %v1037 = vpack.c.b16 %v792, %v791
    %v1038 = vpack.c.b16 %v794, %v793
    %v1039 = vpack.c.b16 %v796, %v795
    %v1040 = vpack.c.b16 %v798, %v797
    %v1041 = vpack.c.b16 %v800, %v799
    %v1042 = vpack.c.b16 %v802, %v801
    %v1043 = vpack.c.b16 %v804, %v803
    %v1044 = vpack.c.b16 %v806, %v805
    %v1045 = vpack.c.b16 %v808, %v807
    %v1046 = vpack.c.b16 %v810, %v809
    %v1047 = vpack.c.b16 %v812, %v811
    %v1048 = vpack.c.b16 %v814, %v813
    %v1049 = vpack.c.b16 %v816, %v815
    %v1050 = vpack.c.b16 %v818, %v817
    %v1051 = vpack.c.b16 %v820, %v819
    %v1052 = vpack.c.b16 %v822, %v821
    %v1053 = vpack.c.b16 %v824, %v823
    %v1054 = vpack.c.b16 %v826, %v825
    %v1055 = vpack.c.b16 %v828, %v827
    %v1056 = vpack.c.b16 %v830, %v829
    %v1057 = vpack.c.b16 %v832, %v831
    %v1058 = vpack.c.b16 %v834, %v833
    %v1059 = vpack.c.b16 %v836, %v835
    %v1060 = vpack.c.b16 %v838, %v837
    %v1061 = vpack.c.b16 %v840, %v839
    %v1062 = vpack.c.b16 %v842, %v841
    %v1063 = vpack.c.b16 %v844, %v843
    %v1064 = vpack.c.b16 %v846, %v845
    %v1065 = vpack.c.b16 %v848, %v847
    %v1066 = vpack.c.b16 %v850, %v849
    %v1067 = vpack.c.b16 %v852, %v851
    %v1068 = vpack.c.b16 %v854, %v853
    %v1069 = vpack.c.b16 %v856, %v855
    %v1070 = vpack.c.b16 %v858, %v857
    %v1071 = vpack.c.b16 %v860, %v859
    %v1072 = vpack.c.b16 %v862, %v861
    %v1073 = vpack.c.b16 %v864, %v863
    %v1074 = vpack.c.b16 %v866, %v865
    %v1075 = vpack.c.b16 %v868, %v867
    %v1076 = vpack.c.b16 %v870, %v869
    %v1077 = vpack.c.b16 %v872, %v871
    %v1078 = vpack.c.b16 %v874, %v873
    %v1079 = vpack.c.b16 %v876, %v875
    %v1080 = vpack.c.b16 %v878, %v877
    %v1081 = vpack.c.b16 %v880, %v879
    %v1082 = vpack.c.b16 %v882, %v881
    %v1083 = vpack.c.b16 %v884, %v883
    %v1084 = vpack.c.b16 %v886, %v885
    %v1085 = vpack.c.b16 %v888, %v887
    %v1086 = vpack.c.b16 %v890, %v889
    %v1087 = vpack.c.b16 %v892, %v891
    %v1088 = vpack.c.b16 %v894, %v893
    %v1089 = vpack.c.b16 %v896, %v895
    %v1090 = vpack.c.b16 %v898, %v897
    %v1091 = vpack.c.b16 %v900, %v899
    %v1092 = vpack.c.b16 %v902, %v901
    %v1093 = vpack.c.b16 %v904, %v903
    %v1094 = vpack.c.b16 %v906, %v905
    %v1095 = vpack.c.b16 %v908, %v907
    %v1096 = vpack.c.b16 %v910, %v909
    %v1097 = vpack.c.b16 %v912, %v911
    %v1098 = vpack.c.b16 %v914, %v913
    %v1099 = vpack.c.b16 %v916, %v915
    %v1100 = vpack.c.b16 %v918, %v917
    %v1101 = vpack.c.b16 %v920, %v919
    %v1102 = vpack.c.b16 %v922, %v921
    %v1103 = vpack.c.b16 %v924, %v923
    %v1104 = vpack.c.b16 %v926, %v925
    %v1105 = vpack.c.b16 %v928, %v927
    %v1106 = vpack.c.b16 %v930, %v929
    %v1107 = vpack.c.b16 %v932, %v931
    %v1108 = vpack.c.b16 %v934, %v933
    %v1109 = vpack.c.b16 %v936, %v935
    %v1110 = vpack.c.b16 %v938, %v937
    %v1111 = vpack.c.b16 %v940, %v939
    %v1112 = vpack.c.b16 %v942, %v941
    %v1113 = vpack.c.b16 %v944, %v943
    %v1114 = vpack.c.b16 %v946, %v945
    %v1115 = vpack.c.b16 %v948, %v947
    %v1116 = vpack.c.b16 %v950, %v949
    %v1117 = vpack.c.b16 %v952, %v951
    %v1118 = vpack.c.b16 %v954, %v953
    %v1119 = vpack.c.b16 %v956, %v955
    %v1120 = vpack.c.b16 %v958, %v957
    %v1121 = vpack.c.b16 %v960, %v959
    %v1122 = vpack.c.b16 %v962, %v961
    %v1123 = vpack.c.b16 %v964, %v963
    %v1124 = vpack.c.b16 %v966, %v965
    %v1125 = vpack.c.b16 %v968, %v967
    %v1126 = vpack.c.b16 %v970, %v969
    %v1127 = vpack.c.b16 %v972, %v971
    %v1128 = vpack.c.b16 %v974, %v973
    %v1129 = vpack.c.b16 %v976, %v975
    %v1130 = vpack.c.b16 %v978, %v977
    %v1131 = vpack.c.b16 %v980, %v979
    %v1132 = vpack.c.b16 %v982, %v981
    %v1133 = vpack.c.b16 %v984, %v983
    %v1134 = vpack.c.b16 %v986, %v985
    %v1135 = vpack.c.b16 %v988, %v987
    %v1136 = vpack.c.b16 %v990, %v989
    %v1137 = vpack.c.b16 %v992, %v991
    %v1138 = vpack.c.b16 %v994, %v993
    %v1139 = vpack.c.b16 %v996, %v995
    %v1140 = vpack.c.b16 %v998, %v997
    %v1141 = vpack.c.b16 %v1000, %v999
    %v1142 = vpack.c.b16 %v1002, %v1001
    %v1143 = vpack.c.b16 %v1004, %v1003
    %v1144 = vpack.c.b16 %v1006, %v1005
    %v1145 = vpack.c.b16 %v1008, %v1007
    %v1146 = vpack.c.b16 %v1010, %v1009
    %v1147 = vpack.c.b16 %v1012, %v1011
    %v1148 = vpack.c.b16 %v1014, %v1013
    %v1149 = vpack.c.b16 %v1016, %v1015
    %v1150 = vpack.c.b16 %v1018, %v1017
    %v1151 = vpack.c.b16 %v1020, %v1019
    %v1152 = vpack.c.b16 %v1022, %v1021
    %v1153 = vpack.c.b16 %v1024, %v1023
    %v1154 = vpack.c.b16 %v1026, %v1025
    %1283 = vmatprep.subr.bf16.mxu0 0
    %1284 = vmatpush1.bf16.msra.mxu0 %v1034
    %1285 = vmatprep.subr.bf16.mxu0 0
    %1286 = vmatpush1.bf16.msra.mxu0 %v1033
    %1287 = vmatprep.subr.bf16.mxu0 0
    %1288 = vmatpush1.bf16.msra.mxu0 %v1032
    %1289 = vmatprep.subr.bf16.mxu0 0
    %1290 = vmatpush1.bf16.msra.mxu0 %v1031
    %1291 = vmatprep.subr.bf16.mxu0 0
    %1292 = vmatpush1.bf16.msra.mxu0 %v1030
    %1293 = vmatprep.subr.bf16.mxu0 0
    %1294 = vmatpush1.bf16.msra.mxu0 %v1029
    %1295 = vmatprep.subr.bf16.mxu0 0
    %1296 = vmatpush1.bf16.msra.mxu0 %v1028
    %1297 = vmatprep.subr.bf16.mxu0 0
    %1298 = vmatpush1.bf16.msra.mxu0 %v1027
    %1299 = vmatprep.subr.bf16.mxu0 0
    %1300 = vmatpush2.bf16.msra.mxu0 %v1042
    %1301 = vmatprep.subr.bf16.mxu0 0
    %1302 = vmatpush2.bf16.msra.mxu0 %v1041
    %1303 = vmatprep.subr.bf16.mxu0 0
    %1304 = vmatpush2.bf16.msra.mxu0 %v1040
    %1305 = vmatprep.subr.bf16.mxu0 0
    %1306 = vmatpush2.bf16.msra.mxu0 %v1039
    %1307 = vmatprep.subr.bf16.mxu0 0
    %1308 = vmatpush2.bf16.msra.mxu0 %v1038
    %1309 = vmatprep.subr.bf16.mxu0 0
    %1310 = vmatpush2.bf16.msra.mxu0 %v1037
    %1311 = vmatprep.subr.bf16.mxu0 0
    %1312 = vmatpush2.bf16.msra.mxu0 %v1036
    %1313 = vmatprep.subr.bf16.mxu0 0
    %1314 = vmatpush2.bf16.msra.mxu0 %v1035
    %1315 = vmatprep.mubr.bf16.mxu0 %v237
    %1316 = vmatmul.mubr.bf16.gmra.mxu0 %v236
    %v1317 = vpop.f32.mrf.mxu0
    %v1318 = vadd.f32 %v513, %v1317
    %v1319 = vpop.f32.mrf.mxu0
    %v1320 = vpop.f32.mrf.mxu0
    %v1321 = vpop.f32.mrf.mxu0
    %1322 = vdwg.mxu0
    %1323 = vmatprep.subr.bf16.mxu0 0
    %1324 = vmatpush1.bf16.msra.mxu0 %v1050
    %1325 = vmatprep.subr.bf16.mxu0 0
    %1326 = vmatpush1.bf16.msra.mxu0 %v1049
    %1327 = vmatprep.subr.bf16.mxu0 0
    %1328 = vmatpush1.bf16.msra.mxu0 %v1048
    %1329 = vmatprep.subr.bf16.mxu0 0
    %1330 = vmatpush1.bf16.msra.mxu0 %v1047
    %1331 = vmatprep.subr.bf16.mxu0 0
    %1332 = vmatpush1.bf16.msra.mxu0 %v1046
    %1333 = vmatprep.subr.bf16.mxu0 0
    %1334 = vmatpush1.bf16.msra.mxu0 %v1045
    %1335 = vmatprep.subr.bf16.mxu0 0
    %1336 = vmatpush1.bf16.msra.mxu0 %v1044
    %1337 = vmatprep.subr.bf16.mxu0 0
    %1338 = vmatpush1.bf16.msra.mxu0 %v1043
    %1339 = vmatprep.subr.bf16.mxu0 0
    %1340 = vmatpush2.bf16.msra.mxu0 %v1058
    %1341 = vmatprep.subr.bf16.mxu0 0
    %1342 = vmatpush2.bf16.msra.mxu0 %v1057
    %1343 = vmatprep.subr.bf16.mxu0 0
    %1344 = vmatpush2.bf16.msra.mxu0 %v1056
    %1345 = vmatprep.subr.bf16.mxu0 0
    %1346 = vmatpush2.bf16.msra.mxu0 %v1055
    %1347 = vmatprep.subr.bf16.mxu0 0
    %1348 = vmatpush2.bf16.msra.mxu0 %v1054
    %1349 = vmatprep.subr.bf16.mxu0 0
    %1350 = vmatpush2.bf16.msra.mxu0 %v1053
    %1351 = vmatprep.subr.bf16.mxu0 0
    %1352 = vmatpush2.bf16.msra.mxu0 %v1052
    %1353 = vmatprep.subr.bf16.mxu0 0
    %1354 = vmatpush2.bf16.msra.mxu0 %v1051
    %1355 = vmatprep.mubr.bf16.mxu0 %v239
    %1356 = vmatmul.mubr.bf16.gmra.mxu0 %v238
    %v1357 = vpop.f32.mrf.mxu0
    %v1358 = vadd.f32 %v1318, %v1357
    %v1359 = vpop.f32.mrf.mxu0
    %v1360 = vpop.f32.mrf.mxu0
    %v1361 = vpop.f32.mrf.mxu0
    %1362 = vdwg.mxu0
    %1363 = vmatprep.subr.bf16.mxu0 0
    %1364 = vmatpush1.bf16.msra.mxu0 %v1066
    %1365 = vmatprep.subr.bf16.mxu0 0
    %1366 = vmatpush1.bf16.msra.mxu0 %v1065
    %1367 = vmatprep.subr.bf16.mxu0 0
    %1368 = vmatpush1.bf16.msra.mxu0 %v1064
    %1369 = vmatprep.subr.bf16.mxu0 0
    %1370 = vmatpush1.bf16.msra.mxu0 %v1063
    %1371 = vmatprep.subr.bf16.mxu0 0
    %1372 = vmatpush1.bf16.msra.mxu0 %v1062
    %1373 = vmatprep.subr.bf16.mxu0 0
    %1374 = vmatpush1.bf16.msra.mxu0 %v1061
    %1375 = vmatprep.subr.bf16.mxu0 0
    %1376 = vmatpush1.bf16.msra.mxu0 %v1060
    %1377 = vmatprep.subr.bf16.mxu0 0
    %1378 = vmatpush1.bf16.msra.mxu0 %v1059
    %1379 = vmatprep.subr.bf16.mxu0 0
    %1380 = vmatpush2.bf16.msra.mxu0 %v1074
    %1381 = vmatprep.subr.bf16.mxu0 0
    %1382 = vmatpush2.bf16.msra.mxu0 %v1073
    %1383 = vmatprep.subr.bf16.mxu0 0
    %1384 = vmatpush2.bf16.msra.mxu0 %v1072
    %1385 = vmatprep.subr.bf16.mxu0 0
    %1386 = vmatpush2.bf16.msra.mxu0 %v1071
    %1387 = vmatprep.subr.bf16.mxu0 0
    %1388 = vmatpush2.bf16.msra.mxu0 %v1070
    %1389 = vmatprep.subr.bf16.mxu0 0
    %1390 = vmatpush2.bf16.msra.mxu0 %v1069
    %1391 = vmatprep.subr.bf16.mxu0 0
    %1392 = vmatpush2.bf16.msra.mxu0 %v1068
    %1393 = vmatprep.subr.bf16.mxu0 0
    %1394 = vmatpush2.bf16.msra.mxu0 %v1067
    %1395 = vmatprep.mubr.bf16.mxu0 %v241
    %1396 = vmatmul.mubr.bf16.gmra.mxu0 %v240
    %v1397 = vpop.f32.mrf.mxu0
    %v1398 = vadd.f32 %v1358, %v1397
    %v1399 = vpop.f32.mrf.mxu0
    %v1400 = vpop.f32.mrf.mxu0
    %v1401 = vpop.f32.mrf.mxu0
    %1402 = vdwg.mxu0
    %1403 = vmatprep.subr.bf16.mxu0 0
    %1404 = vmatpush1.bf16.msra.mxu0 %v1082
    %1405 = vmatprep.subr.bf16.mxu0 0
    %1406 = vmatpush1.bf16.msra.mxu0 %v1081
    %1407 = vmatprep.subr.bf16.mxu0 0
    %1408 = vmatpush1.bf16.msra.mxu0 %v1080
    %1409 = vmatprep.subr.bf16.mxu0 0
    %1410 = vmatpush1.bf16.msra.mxu0 %v1079
    %1411 = vmatprep.subr.bf16.mxu0 0
    %1412 = vmatpush1.bf16.msra.mxu0 %v1078
    %1413 = vmatprep.subr.bf16.mxu0 0
    %1414 = vmatpush1.bf16.msra.mxu0 %v1077
    %1415 = vmatprep.subr.bf16.mxu0 0
    %1416 = vmatpush1.bf16.msra.mxu0 %v1076
    %1417 = vmatprep.subr.bf16.mxu0 0
    %1418 = vmatpush1.bf16.msra.mxu0 %v1075
    %1419 = vmatprep.subr.bf16.mxu0 0
    %1420 = vmatpush2.bf16.msra.mxu0 %v1090
    %1421 = vmatprep.subr.bf16.mxu0 0
    %1422 = vmatpush2.bf16.msra.mxu0 %v1089
    %1423 = vmatprep.subr.bf16.mxu0 0
    %1424 = vmatpush2.bf16.msra.mxu0 %v1088
    %1425 = vmatprep.subr.bf16.mxu0 0
    %1426 = vmatpush2.bf16.msra.mxu0 %v1087
    %1427 = vmatprep.subr.bf16.mxu0 0
    %1428 = vmatpush2.bf16.msra.mxu0 %v1086
    %1429 = vmatprep.subr.bf16.mxu0 0
    %1430 = vmatpush2.bf16.msra.mxu0 %v1085
    %1431 = vmatprep.subr.bf16.mxu0 0
    %1432 = vmatpush2.bf16.msra.mxu0 %v1084
    %1433 = vmatprep.subr.bf16.mxu0 0
    %1434 = vmatpush2.bf16.msra.mxu0 %v1083
    %1435 = vmatprep.mubr.bf16.mxu0 %v243
    %1436 = vmatmul.mubr.bf16.gmra.mxu0 %v242
    %v1437 = vpop.f32.mrf.mxu0
    %v1438 = vadd.f32 %v1398, %v1437
    %v1439 = vpop.f32.mrf.mxu0
    %v1440 = vpop.f32.mrf.mxu0
    %v1441 = vpop.f32.mrf.mxu0
    %1442 = vdwg.mxu0
    %1443 = vmatprep.subr.bf16.mxu0 0
    %1444 = vmatpush1.bf16.msra.mxu0 %v1098
    %1445 = vmatprep.subr.bf16.mxu0 0
    %1446 = vmatpush1.bf16.msra.mxu0 %v1097
    %1447 = vmatprep.subr.bf16.mxu0 0
    %1448 = vmatpush1.bf16.msra.mxu0 %v1096
    %1449 = vmatprep.subr.bf16.mxu0 0
    %1450 = vmatpush1.bf16.msra.mxu0 %v1095
    %1451 = vmatprep.subr.bf16.mxu0 0
    %1452 = vmatpush1.bf16.msra.mxu0 %v1094
    %1453 = vmatprep.subr.bf16.mxu0 0
    %1454 = vmatpush1.bf16.msra.mxu0 %v1093
    %1455 = vmatprep.subr.bf16.mxu0 0
    %1456 = vmatpush1.bf16.msra.mxu0 %v1092
    %1457 = vmatprep.subr.bf16.mxu0 0
    %1458 = vmatpush1.bf16.msra.mxu0 %v1091
    %1459 = vmatprep.subr.bf16.mxu0 0
    %1460 = vmatpush2.bf16.msra.mxu0 %v1106
    %1461 = vmatprep.subr.bf16.mxu0 0
    %1462 = vmatpush2.bf16.msra.mxu0 %v1105
    %1463 = vmatprep.subr.bf16.mxu0 0
    %1464 = vmatpush2.bf16.msra.mxu0 %v1104
    %1465 = vmatprep.subr.bf16.mxu0 0
    %1466 = vmatpush2.bf16.msra.mxu0 %v1103
    %1467 = vmatprep.subr.bf16.mxu0 0
    %1468 = vmatpush2.bf16.msra.mxu0 %v1102
    %1469 = vmatprep.subr.bf16.mxu0 0
    %1470 = vmatpush2.bf16.msra.mxu0 %v1101
    %1471 = vmatprep.subr.bf16.mxu0 0
    %1472 = vmatpush2.bf16.msra.mxu0 %v1100
    %1473 = vmatprep.subr.bf16.mxu0 0
    %1474 = vmatpush2.bf16.msra.mxu0 %v1099
    %1475 = vmatprep.mubr.bf16.mxu0 %v245
    %1476 = vmatmul.mubr.bf16.gmra.mxu0 %v244
    %v1477 = vpop.f32.mrf.mxu0
    %v1478 = vadd.f32 %v1438, %v1477
    %v1479 = vpop.f32.mrf.mxu0
    %v1480 = vpop.f32.mrf.mxu0
    %v1481 = vpop.f32.mrf.mxu0
    %1482 = vdwg.mxu0
    %1483 = vmatprep.subr.bf16.mxu0 0
    %1484 = vmatpush1.bf16.msra.mxu0 %v1114
    %1485 = vmatprep.subr.bf16.mxu0 0
    %1486 = vmatpush1.bf16.msra.mxu0 %v1113
    %1487 = vmatprep.subr.bf16.mxu0 0
    %1488 = vmatpush1.bf16.msra.mxu0 %v1112
    %1489 = vmatprep.subr.bf16.mxu0 0
    %1490 = vmatpush1.bf16.msra.mxu0 %v1111
    %1491 = vmatprep.subr.bf16.mxu0 0
    %1492 = vmatpush1.bf16.msra.mxu0 %v1110
    %1493 = vmatprep.subr.bf16.mxu0 0
    %1494 = vmatpush1.bf16.msra.mxu0 %v1109
    %1495 = vmatprep.subr.bf16.mxu0 0
    %1496 = vmatpush1.bf16.msra.mxu0 %v1108
    %1497 = vmatprep.subr.bf16.mxu0 0
    %1498 = vmatpush1.bf16.msra.mxu0 %v1107
    %1499 = vmatprep.subr.bf16.mxu0 0
    %1500 = vmatpush2.bf16.msra.mxu0 %v1122
    %1501 = vmatprep.subr.bf16.mxu0 0
    %1502 = vmatpush2.bf16.msra.mxu0 %v1121
    %1503 = vmatprep.subr.bf16.mxu0 0
    %1504 = vmatpush2.bf16.msra.mxu0 %v1120
    %1505 = vmatprep.subr.bf16.mxu0 0
    %1506 = vmatpush2.bf16.msra.mxu0 %v1119
    %1507 = vmatprep.subr.bf16.mxu0 0
    %1508 = vmatpush2.bf16.msra.mxu0 %v1118
    %1509 = vmatprep.subr.bf16.mxu0 0
    %1510 = vmatpush2.bf16.msra.mxu0 %v1117
    %1511 = vmatprep.subr.bf16.mxu0 0
    %1512 = vmatpush2.bf16.msra.mxu0 %v1116
    %1513 = vmatprep.subr.bf16.mxu0 0
    %1514 = vmatpush2.bf16.msra.mxu0 %v1115
    %1515 = vmatprep.mubr.bf16.mxu0 %v247
    %1516 = vmatmul.mubr.bf16.gmra.mxu0 %v246
    %v1517 = vpop.f32.mrf.mxu0
    %v1518 = vadd.f32 %v1478, %v1517
    %v1519 = vpop.f32.mrf.mxu0
    %v1520 = vpop.f32.mrf.mxu0
    %v1521 = vpop.f32.mrf.mxu0
    %1522 = vdwg.mxu0
    %1523 = vmatprep.subr.bf16.mxu0 0
    %1524 = vmatpush1.bf16.msra.mxu0 %v1130
    %1525 = vmatprep.subr.bf16.mxu0 0
    %1526 = vmatpush1.bf16.msra.mxu0 %v1129
    %1527 = vmatprep.subr.bf16.mxu0 0
    %1528 = vmatpush1.bf16.msra.mxu0 %v1128
    %1529 = vmatprep.subr.bf16.mxu0 0
    %1530 = vmatpush1.bf16.msra.mxu0 %v1127
    %1531 = vmatprep.subr.bf16.mxu0 0
    %1532 = vmatpush1.bf16.msra.mxu0 %v1126
    %1533 = vmatprep.subr.bf16.mxu0 0
    %1534 = vmatpush1.bf16.msra.mxu0 %v1125
    %1535 = vmatprep.subr.bf16.mxu0 0
    %1536 = vmatpush1.bf16.msra.mxu0 %v1124
    %1537 = vmatprep.subr.bf16.mxu0 0
    %1538 = vmatpush1.bf16.msra.mxu0 %v1123
    %1539 = vmatprep.subr.bf16.mxu0 0
    %1540 = vmatpush2.bf16.msra.mxu0 %v1138
    %1541 = vmatprep.subr.bf16.mxu0 0
    %1542 = vmatpush2.bf16.msra.mxu0 %v1137
    %1543 = vmatprep.subr.bf16.mxu0 0
    %1544 = vmatpush2.bf16.msra.mxu0 %v1136
    %1545 = vmatprep.subr.bf16.mxu0 0
    %1546 = vmatpush2.bf16.msra.mxu0 %v1135
    %1547 = vmatprep.subr.bf16.mxu0 0
    %1548 = vmatpush2.bf16.msra.mxu0 %v1134
    %1549 = vmatprep.subr.bf16.mxu0 0
    %1550 = vmatpush2.bf16.msra.mxu0 %v1133
    %1551 = vmatprep.subr.bf16.mxu0 0
    %1552 = vmatpush2.bf16.msra.mxu0 %v1132
    %1553 = vmatprep.subr.bf16.mxu0 0
    %1554 = vmatpush2.bf16.msra.mxu0 %v1131
    %1555 = vmatprep.mubr.bf16.mxu0 %v249
    %1556 = vmatmul.mubr.bf16.gmra.mxu0 %v248
    %v1557 = vpop.f32.mrf.mxu0
    %v1558 = vadd.f32 %v1518, %v1557
    %v1559 = vpop.f32.mrf.mxu0
    %v1560 = vpop.f32.mrf.mxu0
    %v1561 = vpop.f32.mrf.mxu0
    %1562 = vdwg.mxu0
    %1563 = vmatprep.subr.bf16.mxu0 0
    %1564 = vmatpush1.bf16.msra.mxu0 %v1146
    %1565 = vmatprep.subr.bf16.mxu0 0
    %1566 = vmatpush1.bf16.msra.mxu0 %v1145
    %1567 = vmatprep.subr.bf16.mxu0 0
    %1568 = vmatpush1.bf16.msra.mxu0 %v1144
    %1569 = vmatprep.subr.bf16.mxu0 0
    %1570 = vmatpush1.bf16.msra.mxu0 %v1143
    %1571 = vmatprep.subr.bf16.mxu0 0
    %1572 = vmatpush1.bf16.msra.mxu0 %v1142
    %1573 = vmatprep.subr.bf16.mxu0 0
    %1574 = vmatpush1.bf16.msra.mxu0 %v1141
    %1575 = vmatprep.subr.bf16.mxu0 0
    %1576 = vmatpush1.bf16.msra.mxu0 %v1140
    %1577 = vmatprep.subr.bf16.mxu0 0
    %1578 = vmatpush1.bf16.msra.mxu0 %v1139
    %1579 = vmatprep.subr.bf16.mxu0 0
    %1580 = vmatpush2.bf16.msra.mxu0 %v1154
    %1581 = vmatprep.subr.bf16.mxu0 0
    %1582 = vmatpush2.bf16.msra.mxu0 %v1153
    %1583 = vmatprep.subr.bf16.mxu0 0
    %1584 = vmatpush2.bf16.msra.mxu0 %v1152
    %1585 = vmatprep.subr.bf16.mxu0 0
    %1586 = vmatpush2.bf16.msra.mxu0 %v1151
    %1587 = vmatprep.subr.bf16.mxu0 0
    %1588 = vmatpush2.bf16.msra.mxu0 %v1150
    %1589 = vmatprep.subr.bf16.mxu0 0
    %1590 = vmatpush2.bf16.msra.mxu0 %v1149
    %1591 = vmatprep.subr.bf16.mxu0 0
    %1592 = vmatpush2.bf16.msra.mxu0 %v1148
    %1593 = vmatprep.subr.bf16.mxu0 0
    %1594 = vmatpush2.bf16.msra.mxu0 %v1147
    %1595 = vmatprep.mubr.bf16.mxu0 %v251
    %1596 = vmatmul.mubr.bf16.gmra.mxu0 %v250
    %v1597 = vpop.f32.mrf.mxu0
    %v1598 = vadd.f32 %v1558, %v1597
    %v1599 = vpop.f32.mrf.mxu0
    %v1600 = vpop.f32.mrf.mxu0
    %v1601 = vpop.f32.mrf.mxu0
    %1602 = vdwg.mxu0
    %v1603 = vpack.c.bf16 %v1598, %v1598
    %v1606 = vunpack.c.l.s4 1966171168
    %v1607 = vunpack.c.0.s8 %v1606
    %v1608 = vlaneseq
    %v1609 = vshrl.u32 %v1608, 7
    %v1610 = vsub.s32 %v1607, %v1609
    %v1611 = vrot.slane %v1603, %v1610
    %v1612 = vcombine.high %v1611, %v1611
    %v1614 = vunpack.c.l.s4 1966171168
    %v1615 = vunpack.c.0.s8 %v1614
    %v1616 = vlaneseq
    %v1617 = vshrl.u32 %v1616, 7
    %v1618 = vsub.s32 %v1615, %v1617
    %v1619 = vrot.slane %v1611, %v1618
    %v1621 = vunpack.c.l.s4 1966171168
    %v1622 = vunpack.c.0.s8 %v1621
    %v1623 = vlaneseq
    %v1624 = vshrl.u32 %v1623, 7
    %v1625 = vsub.s32 %v1622, %v1624
    %v1626 = vrot.slane %v1612, %v1625
    %v1627 = vcombine.high %v1619, %v1619
    %v1628 = vcombine.high %v1626, %v1626
    %1633 = vst [vmem:[#allocation7] sm:$0x1] %v1619
    %1634 = vst [vmem:[#allocation7 + $0x1] sm:$0x1] %v1626
    %1635 = vst [vmem:[#allocation7 + $0x2] sm:$0x1] %v1627
    %1636 = vst [vmem:[#allocation7 + $0x3] sm:$0x1] %v1628
    // Predicated region
    $region22: #{linear_fc_pallas.1} parent=1 // pred_check
      _
    $region23: #{linear_fc_pallas.1} parent=1 // pred_check_branch
      %1638 = sbr.rel (0) target = $region25
    $region24: #{linear_fc_pallas.1} parent=1 // pred_region
      %s1640 = ssub.s32 64, 16
      %1641 = vsyncadd [#allocation4], %s1640
      %s1642 = sshll.u32 [#allocation7], 4
      %s1643 = int_to_ptr.vmem [resolvable:$true] %s1642
      %1648 = dma.vmem_to_hbm [thread:$0]  %s1643, 16, %s3, [#allocation4], 16, 16, 1
    $region25: #{linear_fc_pallas.1} parent=1 // pred_fallthru
      _
    // Predicated region
    $region26: #{linear_fc_pallas.1} parent=1 // pred_check
      _
    $region27: #{linear_fc_pallas.1} parent=1 // pred_check_branch
      %1650 = sbr.rel (0) target = $region29
    $region28: #{linear_fc_pallas.1} parent=1 // pred_region
      %1651 = dma.done [#allocation4], 64
    $region29: #{linear_fc_pallas.1} parent=1 // pred_fallthru
      _
    %1652 = vsyncpa [#allocation3], 1
    %1653 = vsyncpa [#allocation6], 1
    %1654 = vsyncpa [#allocation4], 1

</llo_original>
